<compile_context>
chip_gen: v6e
topology: v6e:2x2x1
jax: 0.10.0
libtpu: 0.0.40
codegen_flags: <defaults>
</compile_context>

<pallas_src>
import jax
import jax.numpy as jnp
from jax.experimental import pallas as pl
from jax.experimental.pallas import tpu as pltpu


# ------------------------------ kernel bodies ---------------------------------

def _ffn_kernel_resident(x_ref, w1_ref, b1_ref, w2_ref, b2_ref, o_ref):
    # Weights fully VMEM-resident (constant block index); no reduction axis.
    x = x_ref[...].astype(jnp.bfloat16)                        # MXU-friendly
    h = jnp.dot(x, w1_ref[...], preferred_element_type=jnp.float32)
    h = jnp.maximum(h + b1_ref[...], 0.0)                      # bias+ReLU in f32
    out = jnp.dot(h.astype(jnp.bfloat16), w2_ref[...],
                  preferred_element_type=jnp.float32)
    o_ref[...] = (out + b2_ref[...]).astype(o_ref.dtype)


def _ffn_kernel_tiled_f32out(x_ref, w1_ref, b1_ref, w2_ref, b2_ref, o_ref):
    # Hidden dim tiled (reduction axis last); accumulate directly into the f32
    # output block (no scratch, no final VMEM->VMEM copy).
    h_idx = pl.program_id(1)

    @pl.when(h_idx == 0)
    def _():
        o_ref[...] = jnp.zeros_like(o_ref)

    x = x_ref[...].astype(jnp.bfloat16)
    h = jnp.dot(x, w1_ref[...], preferred_element_type=jnp.float32)
    h = jnp.maximum(h + b1_ref[...], 0.0)
    o_ref[...] += jnp.dot(h.astype(jnp.bfloat16), w2_ref[...],
                          preferred_element_type=jnp.float32)

    @pl.when(h_idx == pl.num_programs(1) - 1)
    def _():
        o_ref[...] += b2_ref[...]


def _ffn_kernel_tiled_scratch(x_ref, w1_ref, b1_ref, w2_ref, b2_ref, o_ref,
                              acc_ref):
    # Same as above, but with an f32 scratch accumulator for non-f32 outputs.
    h_idx = pl.program_id(1)

    @pl.when(h_idx == 0)
    def _():
        acc_ref[...] = jnp.zeros_like(acc_ref)

    x = x_ref[...].astype(jnp.bfloat16)
    h = jnp.dot(x, w1_ref[...], preferred_element_type=jnp.float32)
    h = jnp.maximum(h + b1_ref[...], 0.0)
    acc_ref[...] += jnp.dot(h.astype(jnp.bfloat16), w2_ref[...],
                            preferred_element_type=jnp.float32)

    @pl.when(h_idx == pl.num_programs(1) - 1)
    def _():
        o_ref[...] = (acc_ref[...] + b2_ref[...]).astype(o_ref.dtype)


# --------------------------------- wrapper -------------------------------------

def _round_up(n, m):
    return (n + m - 1) // m * m


def _pick_hidden_tile(H, cap):
    """Prefer the largest multiple of 256 that divides H (v6e/v7x MXU is
    2x256^2), then 128, else the full H."""
    th = min(cap, H) // 256 * 256
    while th >= 256:
        if H % th == 0:
            return th
        th -= 256
    if H % 128 == 0 and cap >= 128:
        return 128
    # TODO(synk): pad odd hidden sizes to a 128 multiple instead of full-H blocks.
    return H


def positionwise_feed_forward(x, w1, b1, w2, b2, *,
                              block_m=512, block_h=512,
                              weights_resident=None,
                              vmem_limit_bytes=48 * 1024 * 1024):
    """x: (B, L, D); w1: (D, H); b1: (H,); w2: (H, D); b2: (D,) -> (B, L, D).

    Weights are stored pre-transposed in (in, out) layout (no per-call .T).
    TODO(synk): dropout is eval-mode identity (no RNG mask in the kernel).
    """
    B, L, D = x.shape
    Din, H = w1.shape
    assert Din == D and w2.shape == (H, D) and b1.shape == (H,) and b2.shape == (D,)
    M = B * L
    out_dtype = x.dtype

    xf = x.reshape(M, D)                      # no pad: ragged last tile is masked
    w1b = w1.astype(jnp.bfloat16)             # halves weight HBM/VMEM traffic
    w2b = w2.astype(jnp.bfloat16)
    b1f = b1.astype(jnp.float32).reshape(1, H)
    b2f = b2.astype(jnp.float32).reshape(1, D)

    # Row tile: sublane-aligned; ensure >= 2 row tiles so the "parallel" axis can
    # actually shard across v7x's two TensorCores.
    tm = min(block_m, _round_up(M, 8))
    if pl.cdiv(M, tm) < 2 and M > 8:
        tm = _round_up(pl.cdiv(M, 2), 8)
    n_rows = pl.cdiv(M, tm)

    x_bytes = xf.dtype.itemsize
    o_bytes = jnp.dtype(out_dtype).itemsize
    flops = 4 * M * D * H

    # Double-buffered per-step footprint with fully-resident bf16 weights.
    resident_bytes = 2 * (2 * D * H * 2                      # bf16 W1 + W2
                          + tm * D * (x_bytes + o_bytes)     # x tile + out tile
                          + 4 * (H + D))                     # f32 biases
    if weights_resident is None:
        weights_resident = resident_bytes <= int(0.8 * vmem_limit_bytes)

    if weights_resident:
        bytes_accessed = (M * D * (x_bytes + o_bytes)
                          + 2 * D * H * 2 + 4 * (H + D))
        out_flat = pl.pallas_call(
            _ffn_kernel_resident,
            out_shape=jax.ShapeDtypeStruct((M, D), out_dtype),
            grid_spec=pltpu.PrefetchScalarGridSpec(
                num_scalar_prefetch=0,
                grid=(n_rows,),
                in_specs=[
                    pl.BlockSpec((tm, D), lambda i: (i, 0)),   # x rows
                    pl.BlockSpec((D, H),  lambda i: (0, 0)),   # W1 (resident)
                    pl.BlockSpec((1, H),  lambda i: (0, 0)),   # b1
                    pl.BlockSpec((H, D),  lambda i: (0, 0)),   # W2 (resident)
                    pl.BlockSpec((1, D),  lambda i: (0, 0)),   # b2
                ],
                out_specs=pl.BlockSpec((tm, D), lambda i: (i, 0)),
            ),
            compiler_params=pltpu.CompilerParams(
                dimension_semantics=("parallel",),
                vmem_limit_bytes=vmem_limit_bytes),
            cost_estimate=pl.CostEstimate(flops=flops, transcendentals=0,
                                          bytes_accessed=bytes_accessed),
        )(xf, w1b, b1f, w2b, b2f)
    else:
        th = _pick_hidden_tile(H, block_h)
        n_h = pl.cdiv(H, th)
        use_scratch = out_dtype != jnp.float32
        kernel = _ffn_kernel_tiled_scratch if use_scratch else _ffn_kernel_tiled_f32out
        scratch = [pltpu.VMEM((tm, D), jnp.float32)] if use_scratch else []
        # Weights are re-fetched once per row tile in this path.
        bytes_accessed = (M * D * (x_bytes + o_bytes)
                          + n_rows * (2 * D * H * 2 + 4 * H) + 4 * D)
        out_flat = pl.pallas_call(
            kernel,
            out_shape=jax.ShapeDtypeStruct((M, D), out_dtype),
            grid_spec=pltpu.PrefetchScalarGridSpec(
                num_scalar_prefetch=0,
                grid=(n_rows, n_h),
                in_specs=[
                    pl.BlockSpec((tm, D), lambda i, h: (i, 0)),   # x rows
                    pl.BlockSpec((D, th), lambda i, h: (0, h)),   # W1 hidden slice
                    pl.BlockSpec((1, th), lambda i, h: (0, h)),   # b1 hidden slice
                    pl.BlockSpec((th, D), lambda i, h: (h, 0)),   # W2 hidden slice
                    pl.BlockSpec((1, D),  lambda i, h: (0, 0)),   # b2
                ],
                out_specs=pl.BlockSpec((tm, D), lambda i, h: (i, 0)),
                scratch_shapes=scratch,
            ),
            compiler_params=pltpu.CompilerParams(
                dimension_semantics=("parallel", "arbitrary"),
                vmem_limit_bytes=vmem_limit_bytes),
            cost_estimate=pl.CostEstimate(flops=flops, transcendentals=0,
                                          bytes_accessed=bytes_accessed),
        )(xf, w1b, b1f, w2b, b2f)

    return out_flat.reshape(B, L, D)


# --------------------------- pure-JAX references --------------------------------

def _reference_f32(x, w1, b1, w2, b2):
    h = jnp.maximum(x @ w1 + b1, 0.0)
    return h @ w2 + b2


def _reference_bf16(x, w1, b1, w2, b2):
    # Matches the kernel's numerics: bf16 MXU inputs, f32 accumulation/bias/ReLU.
    h = jnp.dot(x.astype(jnp.bfloat16), w1.astype(jnp.bfloat16),
                preferred_element_type=jnp.float32)
    h = jnp.maximum(h + b1, 0.0)
    out = jnp.dot(h.astype(jnp.bfloat16), w2.astype(jnp.bfloat16),
                  preferred_element_type=jnp.float32)
    return out + b2


if __name__ == "__main__":
    # Small shapes: batch=2, seq=24, model dim=128 (lane-dense), hidden=256.
    B, L, D, H = 2, 24, 128, 256
    key = jax.random.PRNGKey(0)
    kx, k1, k2, k3, k4 = jax.random.split(key, 5)
    x = jax.random.normal(kx, (B, L, D), jnp.float32)
    # Weights pre-transposed to (in, out) layout.
    w1 = jax.random.normal(k1, (D, H), jnp.float32) * 0.05
    b1 = jax.random.normal(k2, (H,), jnp.float32) * 0.05
    w2 = jax.random.normal(k3, (H, D), jnp.float32) * 0.05
    b2 = jax.random.normal(k4, (D,), jnp.float32) * 0.05

    ref_f32 = _reference_f32(x, w1, b1, w2, b2)
    ref_bf16 = _reference_bf16(x, w1, b1, w2, b2)

    # 1) Auto path: bf16 weights VMEM-resident, row-only grid, >= 2 row tiles.
    out_res = jax.block_until_ready(positionwise_feed_forward(x, w1, b1, w2, b2))

    # 2) Forced reduction-tiled path (grid = (3, 2)): accumulate-into-o_ref,
    #    pl.when init/finalize.
    out_tiled = jax.block_until_ready(
        positionwise_feed_forward(x, w1, b1, w2, b2,
                                  block_m=16, block_h=128,
                                  weights_resident=False))

    # 3) Ragged last row tile (M=48, tm=32) + bf16 activations: exercises the
    #    masked boundary handling and the scratch-accumulator variant.
    out_rag = jax.block_until_ready(
        positionwise_feed_forward(x.astype(jnp.bfloat16), w1, b1, w2, b2,
                                  block_m=32, block_h=128,
                                  weights_resident=False))

    for out in (out_res, out_tiled):
        assert out.shape == (B, L, D) and out.dtype == jnp.float32, (out.shape, out.dtype)
        assert bool(jnp.allclose(out, ref_bf16, atol=5e-3, rtol=5e-3))
        assert bool(jnp.allclose(out, ref_f32, atol=3e-2, rtol=3e-2))

    assert out_rag.shape == (B, L, D) and out_rag.dtype == jnp.bfloat16
    assert bool(jnp.allclose(out_rag.astype(jnp.float32), ref_f32,
                             atol=8e-2, rtol=8e-2))

    print("KERNEL_OK")
</pallas_src>

<mosaic_0001>
module attributes {stable_mosaic.version = 11 : i64} {
  func.func @_ffn_kernel_resident(%arg0: i32, %arg1: memref<24x128xf32, #tpu.memory_space<vmem>>, %arg2: memref<128x256xbf16, #tpu.memory_space<vmem>>, %arg3: memref<1x256xf32, #tpu.memory_space<vmem>>, %arg4: memref<256x128xbf16, #tpu.memory_space<vmem>>, %arg5: memref<1x128xf32, #tpu.memory_space<vmem>>, %arg6: memref<24x128xf32, #tpu.memory_space<vmem>>) attributes {dimension_semantics = [#tpu.dimension_semantics<parallel>], iteration_bounds = array<i64: 2>, scalar_prefetch = 0 : i64, scratch_operands = 0 : i64, tpu.core_type = #tpu.core_type<tc>, window_params = [{transform_indices = @transform_0, window_bounds = array<i64: 24, 128>}, {pipeline_mode = #tpu.pipeline_mode<synchronous>, transform_indices = @transform_1, window_bounds = array<i64: 128, 256>}, {pipeline_mode = #tpu.pipeline_mode<synchronous>, transform_indices = @transform_2, window_bounds = array<i64: 1, 256>}, {pipeline_mode = #tpu.pipeline_mode<synchronous>, transform_indices = @transform_3, window_bounds = array<i64: 256, 128>}, {pipeline_mode = #tpu.pipeline_mode<synchronous>, transform_indices = @transform_4, window_bounds = array<i64: 1, 128>}, {transform_indices = @transform_5, window_bounds = array<i64: 24, 128>}]} {
    %c0 = arith.constant 0 : index
    %c0_0 = arith.constant 0 : index
    %0 = vector.load %arg1[%c0, %c0_0] : memref<24x128xf32, #tpu.memory_space<vmem>>, vector<24x128xf32>
    %1 = arith.truncf %0 : vector<24x128xf32> to vector<24x128xbf16>
    %c0_1 = arith.constant 0 : index
    %c0_2 = arith.constant 0 : index
    %2 = vector.load %arg2[%c0_1, %c0_2] : memref<128x256xbf16, #tpu.memory_space<vmem>>, vector<128x256xbf16>
    %cst = arith.constant dense<0.000000e+00> : vector<24x256xf32>
    %3 = tpu.matmul %1, %2, %cst {dimension_numbers = #tpu.dot_dimension_numbers<[1], [0], [0], [1], [0, 0, 1, 1], [], []>} : vector<24x128xbf16>, vector<128x256xbf16>, vector<24x256xf32> -> vector<24x256xf32>
    %c0_3 = arith.constant 0 : index
    %c0_4 = arith.constant 0 : index
    %4 = vector.load %arg3[%c0_3, %c0_4] : memref<1x256xf32, #tpu.memory_space<vmem>>, vector<1x256xf32>
    %5 = vector.broadcast %4 : vector<1x256xf32> to vector<24x256xf32>
    %6 = arith.addf %3, %5 : vector<24x256xf32>
    %cst_5 = arith.constant 0.000000e+00 : f32
    %7 = vector.broadcast %cst_5 : f32 to vector<24x256xf32>
    %8 = arith.maximumf %6, %7 : vector<24x256xf32>
    %9 = arith.truncf %8 : vector<24x256xf32> to vector<24x256xbf16>
    %c0_6 = arith.constant 0 : index
    %c0_7 = arith.constant 0 : index
    %10 = vector.load %arg4[%c0_6, %c0_7] : memref<256x128xbf16, #tpu.memory_space<vmem>>, vector<256x128xbf16>
    %cst_8 = arith.constant dense<0.000000e+00> : vector<24x128xf32>
    %11 = tpu.matmul %9, %10, %cst_8 {dimension_numbers = #tpu.dot_dimension_numbers<[1], [0], [0], [1], [0, 0, 1, 1], [], []>} : vector<24x256xbf16>, vector<256x128xbf16>, vector<24x128xf32> -> vector<24x128xf32>
    %c0_9 = arith.constant 0 : index
    %c0_10 = arith.constant 0 : index
    %12 = vector.load %arg5[%c0_9, %c0_10] : memref<1x128xf32, #tpu.memory_space<vmem>>, vector<1x128xf32>
    %13 = vector.broadcast %12 : vector<1x128xf32> to vector<24x128xf32>
    %14 = arith.addf %11, %13 : vector<24x128xf32>
    %c0_11 = arith.constant 0 : index
    %c0_12 = arith.constant 0 : index
    %15 = vector.load %arg6[%c0_11, %c0_12] : memref<24x128xf32, #tpu.memory_space<vmem>>, vector<24x128xf32>
    tpu.vector_store %arg6[%c0_11, %c0_12], %14 {strides = array<i32>} : memref<24x128xf32, #tpu.memory_space<vmem>>, vector<24x128xf32>,
    return
  }
  func.func @transform_0(%arg0: i32) -> (i32, i32) {
    %c0_i32 = arith.constant 0 : i32
    %c0_i32_0 = arith.constant 0 : i32
    return %arg0, %c0_i32 : i32, i32
  }
  func.func @transform_1(%arg0: i32) -> (i32, i32) {
    %c0_i32 = arith.constant 0 : i32
    %c0_i32_0 = arith.constant 0 : i32
    %c0_i32_1 = arith.constant 0 : i32
    return %c0_i32, %c0_i32_0 : i32, i32
  }
  func.func @transform_2(%arg0: i32) -> (i32, i32) {
    %c0_i32 = arith.constant 0 : i32
    %c0_i32_0 = arith.constant 0 : i32
    %c0_i32_1 = arith.constant 0 : i32
    return %c0_i32, %c0_i32_0 : i32, i32
  }
  func.func @transform_3(%arg0: i32) -> (i32, i32) {
    %c0_i32 = arith.constant 0 : i32
    %c0_i32_0 = arith.constant 0 : i32
    %c0_i32_1 = arith.constant 0 : i32
    return %c0_i32, %c0_i32_0 : i32, i32
  }
  func.func @transform_4(%arg0: i32) -> (i32, i32) {
    %c0_i32 = arith.constant 0 : i32
    %c0_i32_0 = arith.constant 0 : i32
    %c0_i32_1 = arith.constant 0 : i32
    return %c0_i32, %c0_i32_0 : i32, i32
  }
  func.func @transform_5(%arg0: i32) -> (i32, i32) {
    %c0_i32 = arith.constant 0 : i32
    %c0_i32_0 = arith.constant 0 : i32
    return %arg0, %c0_i32 : i32, i32
  }
}

</mosaic_0001>

<llo_original>
// kernel: tpu_custom_call.1
$region0: #{tpu_custom_call.1}
  #allocation0 [shape = 'u32[]', space=smem, size = 0x4, offset = 0x4, fixed_abs, tag = 'smem constant byte address 0x4 - core index']
  #allocation1 [shape = 'u32[144,128]{1,0:T(1,128)}', space=vmem, size = 0x12000, scoped, tag = 'internal scratch']
  %s0 = inlined_call_operand.hbm [shape: f32[48,128], index: 0, kind: input, shape index: {}]
  %s1 = inlined_call_operand.hbm [shape: bf16[128,256], index: 1, kind: input, shape index: {}]
  %s2 = inlined_call_operand.vmem [shape: f32[1,256], index: 2, kind: input, shape index: {}]
  %s3 = inlined_call_operand.hbm [shape: bf16[256,128], index: 3, kind: input, shape index: {}]
  %s4 = inlined_call_operand.vmem [shape: f32[1,128], index: 4, kind: input, shape index: {}]
  %s5 = inlined_call_operand.hbm [shape: f32[48,128], index: 5, kind: output, shape index: {}]
  %s6 = sld [smem:[#allocation0]]
  $region65: #{tpu_custom_call.1} parent=0
    _
  %s8 = ssub.s32 1, %s6
  %s9 = scalar_select 0, %s8, %s6
  $region1: #{tpu_custom_call.1} parent=0
    #allocation2 [shape = 'u8[24576]{0}', space=vmem, size = 0x6000, scoped, tag = 'input window, operand 0']
    #allocation3 [shape = 's32[2]{0}', space=sflag, size = 0x8, scoped, tag = 'scoped memory for tpu_custom_call.1']
    #allocation4 [shape = 's32[2]{0}', space=sflag, size = 0x8, scoped, tag = 'scoped memory for tpu_custom_call.1']
    #allocation5 [shape = 'u8[65536]{0}', space=vmem, size = 0x10000, scoped, tag = 'input window, operand 1, single buffered']
    #allocation6 [shape = 's32[1]{0}', space=sflag, size = 0x4, scoped, tag = 'scoped memory for tpu_custom_call.1']
    #allocation7 [shape = 'u8[65536]{0}', space=vmem, size = 0x10000, scoped, tag = 'input window, operand 3, single buffered']
    #allocation8 [shape = 'u8[24576]{0}', space=vmem, size = 0x6000, scoped, tag = 'output window, operand 0']
    %10 = vsyncpa [#allocation3], 0
    %s11 = scalar_lea.sflag [#allocation3], 1
    %12 = vsyncpa %s11, 0
    %13 = vsyncpa [#allocation6], 0
    %14 = vsyncpa [#allocation4], 0
    %s15 = scalar_lea.sflag [#allocation4], 1
    %16 = vsyncpa %s15, 0
    loop: start=0, step=1, limit=4
    $region2: #{tpu_custom_call.1} parent=1 // loop_pre_header
      _
    $region3: #{tpu_custom_call.1} parent=1 // loop_header
      %s18 = sphi 0, %s22
      %p19 = scmp.ge.s32.totalorder %s18, 4
      %s28 = sphi 0, %s30
      %s31 = sphi 0, %s28
      %s32 = sphi 0, %s31
      %s48 = sphi 0, %s32
      %s52 = sphi 0, %s52
      %s54 = sphi 0, %s52
      %s55 = sphi 0, %s54
      %s69 = sphi 0, %s55
      %s73 = sphi 0, %s73
      %s75 = sphi 0, %s73
      %s76 = sphi 0, %s75
      %s90 = sphi 0, %s76
      %s94 = sphi 0, %s94
      %s96 = sphi 0, %s94
      %s97 = sphi 0, %s96
      %s111 = sphi 0, %s97
      %s115 = sphi 0, %s115
      %s117 = sphi 0, %s115
      %s118 = sphi 0, %s117
      %s132 = sphi 0, %s118
      %s138 = sphi 0, %s140
      %s141 = sphi 0, %s138
      %s142 = sphi 0, %s141
      %s158 = sphi 0, %s142
    $region4: #{tpu_custom_call.1} parent=1 // loop_header_branch
      %21 = sbr.rel (%p19) target = $region8
    $region5: #{tpu_custom_call.1} parent=1 // loop_body
      %s23 = ssub.s32 %s18, 1
      %s24 = ssub.s32 %s18, 2
      %s25 = sadd.s32 %s18, 1
      %s26 = ssub.s32 %s18, %s25
      %p27 = scmp.eq.s32.totalorder %s26, 0
      %s29 = sadd.s32 %s28, 1
      %s30 = scalar_select %p27, %s28, %s29
      %p33 = pneg %p27
      %p34 = scmp.eq.s32.totalorder %s18, 1
      %p35 = por %p33, %p34
      %p36 = scmp.ne.s32.totalorder %s28, %s31
      %p37 = scmp.eq.s32.totalorder %s18, 0
      %p38 = por %p36, %p37
      %p39 = scmp.ne.s32.totalorder %s28, %s31
      %p40 = scmp.eq.s32.totalorder %s23, 1
      %p41 = por %p39, %p40
      %p42 = scmp.ne.s32.totalorder %s31, %s32
      %p43 = scmp.eq.s32.totalorder %s23, 0
      %p44 = por %p42, %p43
      %p45 = scmp.ne.s32.totalorder %s31, %s32
      %p46 = scmp.eq.s32.totalorder %s24, 1
      %p47 = por %p45, %p46
      %p49 = scmp.ne.s32.totalorder %s32, %s48
      %p50 = scmp.eq.s32.totalorder %s24, 0
      %p51 = por %p49, %p50
      %s53 = sadd.s32 %s52, 1
      %p56 = scmp.eq.s32.totalorder %s18, 1
      %p57 = scmp.ne.s32.totalorder %s52, %s54
      %p58 = scmp.eq.s32.totalorder %s18, 0
      %p59 = por %p57, %p58
      %p60 = scmp.ne.s32.totalorder %s52, %s54
      %p61 = scmp.eq.s32.totalorder %s23, 1
      %p62 = por %p60, %p61
      %p63 = scmp.ne.s32.totalorder %s54, %s55
      %p64 = scmp.eq.s32.totalorder %s23, 0
      %p65 = por %p63, %p64
      %p66 = scmp.ne.s32.totalorder %s54, %s55
      %p67 = scmp.eq.s32.totalorder %s24, 1
      %p68 = por %p66, %p67
      %p70 = scmp.ne.s32.totalorder %s55, %s69
      %p71 = scmp.eq.s32.totalorder %s24, 0
      %p72 = por %p70, %p71
      %s74 = sadd.s32 %s73, 1
      %p77 = scmp.eq.s32.totalorder %s18, 1
      %p78 = scmp.ne.s32.totalorder %s73, %s75
      %p79 = scmp.eq.s32.totalorder %s18, 0
      %p80 = por %p78, %p79
      %p81 = scmp.ne.s32.totalorder %s73, %s75
      %p82 = scmp.eq.s32.totalorder %s23, 1
      %p83 = por %p81, %p82
      %p84 = scmp.ne.s32.totalorder %s75, %s76
      %p85 = scmp.eq.s32.totalorder %s23, 0
      %p86 = por %p84, %p85
      %p87 = scmp.ne.s32.totalorder %s75, %s76
      %p88 = scmp.eq.s32.totalorder %s24, 1
      %p89 = por %p87, %p88
      %p91 = scmp.ne.s32.totalorder %s76, %s90
      %p92 = scmp.eq.s32.totalorder %s24, 0
      %p93 = por %p91, %p92
      %s95 = sadd.s32 %s94, 1
      %p98 = scmp.eq.s32.totalorder %s18, 1
      %p99 = scmp.ne.s32.totalorder %s94, %s96
      %p100 = scmp.eq.s32.totalorder %s18, 0
      %p101 = por %p99, %p100
      %p102 = scmp.ne.s32.totalorder %s94, %s96
      %p103 = scmp.eq.s32.totalorder %s23, 1
      %p104 = por %p102, %p103
      %p105 = scmp.ne.s32.totalorder %s96, %s97
      %p106 = scmp.eq.s32.totalorder %s23, 0
      %p107 = por %p105, %p106
      %p108 = scmp.ne.s32.totalorder %s96, %s97
      %p109 = scmp.eq.s32.totalorder %s24, 1
      %p110 = por %p108, %p109
      %p112 = scmp.ne.s32.totalorder %s97, %s111
      %p113 = scmp.eq.s32.totalorder %s24, 0
      %p114 = por %p112, %p113
      %s116 = sadd.s32 %s115, 1
      %p119 = scmp.eq.s32.totalorder %s18, 1
      %p120 = scmp.ne.s32.totalorder %s115, %s117
      %p121 = scmp.eq.s32.totalorder %s18, 0
      %p122 = por %p120, %p121
      %p123 = scmp.ne.s32.totalorder %s115, %s117
      %p124 = scmp.eq.s32.totalorder %s23, 1
      %p125 = por %p123, %p124
      %p126 = scmp.ne.s32.totalorder %s117, %s118
      %p127 = scmp.eq.s32.totalorder %s23, 0
      %p128 = por %p126, %p127
      %p129 = scmp.ne.s32.totalorder %s117, %s118
      %p130 = scmp.eq.s32.totalorder %s24, 1
      %p131 = por %p129, %p130
      %p133 = scmp.ne.s32.totalorder %s118, %s132
      %p134 = scmp.eq.s32.totalorder %s24, 0
      %p135 = por %p133, %p134
      %s136 = ssub.s32 %s18, %s25
      %p137 = scmp.eq.s32.totalorder %s136, 0
      %s139 = sadd.s32 %s138, 1
      %s140 = scalar_select %p137, %s138, %s139
      %p143 = pneg %p137
      %p144 = scmp.eq.s32.totalorder %s18, 1
      %p145 = por %p143, %p144
      %p146 = scmp.ne.s32.totalorder %s138, %s141
      %p147 = scmp.eq.s32.totalorder %s18, 0
      %p148 = por %p146, %p147
      %p149 = scmp.ne.s32.totalorder %s138, %s141
      %p150 = scmp.eq.s32.totalorder %s23, 1
      %p151 = por %p149, %p150
      %p152 = scmp.ne.s32.totalorder %s141, %s142
      %p153 = scmp.eq.s32.totalorder %s23, 0
      %p154 = por %p152, %p153
      %p155 = scmp.ne.s32.totalorder %s141, %s142
      %p156 = scmp.eq.s32.totalorder %s24, 1
      %p157 = por %p155, %p156
      %p159 = scmp.ne.s32.totalorder %s142, %s158
      %p160 = scmp.eq.s32.totalorder %s24, 0
      %p161 = por %p159, %p160
      %p162 = scmp.le.s32.totalorder 1, %s18
      %p163 = scmp.lt.s32.totalorder %s18, 3
      %p164 = pnand %p162, %p163
      %p165 = pneg %p164
      // Predicated region
      $region9: #{tpu_custom_call.1} parent=5 // pred_check
        _
      $region10: #{tpu_custom_call.1} parent=5 // pred_check_branch
        %167 = sbr.rel (%p164) target = $region12
      $region11: #{tpu_custom_call.1} parent=5 // pred_region
        %s168 = ssub.s32 %s18, 1
        // Predicated region
        $region13: #{tpu_custom_call.1} parent=11 // pred_check
          %p169 = pneg %p65
        $region14: #{tpu_custom_call.1} parent=11 // pred_check_branch
          %171 = sbr.rel (%p169) target = $region16
        $region15: #{tpu_custom_call.1} parent=11 // pred_region
          %s173 = ssub.s32 2048, 2048
          %174 = vsyncadd [#allocation6], %s173
          %s175 = sshll.u32 [#allocation5], 4
          %s176 = int_to_ptr.vmem [resolvable:$true] %s175
          %181 = dma.hbm_to_vmem [thread:$0]  %s1, 2048, %s176, [#allocation6], 128, 128, 8
        $region16: #{tpu_custom_call.1} parent=11 // pred_fallthru
          _
        // Predicated region
        $region17: #{tpu_custom_call.1} parent=11 // pred_check
          %p182 = pneg %p86
        $region18: #{tpu_custom_call.1} parent=11 // pred_check_branch
          %184 = sbr.rel (%p182) target = $region20
        $region19: #{tpu_custom_call.1} parent=11 // pred_region
          _
        $region20: #{tpu_custom_call.1} parent=11 // pred_fallthru
          _
        // Predicated region
        $region21: #{tpu_custom_call.1} parent=11 // pred_check
          %p185 = pneg %p107
        $region22: #{tpu_custom_call.1} parent=11 // pred_check_branch
          %187 = sbr.rel (%p185) target = $region24
        $region23: #{tpu_custom_call.1} parent=11 // pred_region
          %s189 = ssub.s32 2048, 2048
          %190 = vsyncadd [#allocation6], %s189
          %s191 = sshll.u32 [#allocation7], 4
          %s192 = int_to_ptr.vmem [resolvable:$true] %s191
          %197 = dma.hbm_to_vmem [thread:$0]  %s3, 2048, %s192, [#allocation6], 64, 64, 4
        $region24: #{tpu_custom_call.1} parent=11 // pred_fallthru
          _
        // Predicated region
        $region25: #{tpu_custom_call.1} parent=11 // pred_check
          %p198 = pneg %p128
        $region26: #{tpu_custom_call.1} parent=11 // pred_check_branch
          %200 = sbr.rel (%p198) target = $region28
        $region27: #{tpu_custom_call.1} parent=11 // pred_region
          _
        $region28: #{tpu_custom_call.1} parent=11 // pred_fallthru
          _
      $region12: #{tpu_custom_call.1} parent=5 // pred_fallthru
        _
      %p201 = scmp.lt.s32.totalorder %s18, 2
      // Predicated region
      $region29: #{tpu_custom_call.1} parent=5 // pred_check
        %p202 = pneg %p201
      $region30: #{tpu_custom_call.1} parent=5 // pred_check_branch
        %204 = sbr.rel (%p202) target = $region32
      $region31: #{tpu_custom_call.1} parent=5 // pred_region
        // Predicated region
        $region33: #{tpu_custom_call.1} parent=31 // pred_check
          %p205 = pneg %p38
        $region34: #{tpu_custom_call.1} parent=31 // pred_check_branch
          %207 = sbr.rel (%p205) target = $region36
        $region35: #{tpu_custom_call.1} parent=31 // pred_region
          %s208 = sand.u32 %s28, 1
          %s209 = scalar_lea.sflag [#allocation3], %s208
          %s210 = sand.u32 %s28, 1
          %s211 = smul.addr %s210, 24
          %s212 = scalar_lea.vmem [#allocation2], %s211
          %s213 = smul.u32 3, %s18
          %s215 = ssub.s32 384, 384
          %216 = vsyncadd %s209, %s215
          %s217 = smul.addr %s213, 128
          %s218 = scalar_lea.hbm %s0, %s217
          %s219 = sshll.u32 %s212, 4
          %s220 = int_to_ptr.vmem [resolvable:$true] %s219
          %225 = dma.hbm_to_vmem [thread:$0]  %s218, 384, %s220, %s209, 128, 128, 8
        $region36: #{tpu_custom_call.1} parent=31 // pred_fallthru
          _
      $region32: #{tpu_custom_call.1} parent=5 // pred_fallthru
        _
      %p226 = scmp.le.s32.totalorder 1, %s18
      %p227 = scmp.lt.s32.totalorder %s18, 3
      %p228 = pnand %p226, %p227
      %p229 = pneg %p228
      // Predicated region
      $region37: #{tpu_custom_call.1} parent=5 // pred_check
        _
      $region38: #{tpu_custom_call.1} parent=5 // pred_check_branch
        %231 = sbr.rel (%p228) target = $region40
      $region39: #{tpu_custom_call.1} parent=5 // pred_region
        %s232 = ssub.s32 %s18, 1
        %s233 = sand.u32 %s31, 1
        %s234 = scalar_lea.sflag [#allocation3], %s233
        %s235 = sand.u32 %s31, 1
        %s236 = smul.addr %s235, 24
        %s237 = scalar_lea.vmem [#allocation2], %s236
        // Predicated region
        $region41: #{tpu_custom_call.1} parent=39 // pred_check
          %p238 = pneg %p44
        $region42: #{tpu_custom_call.1} parent=39 // pred_check_branch
          %240 = sbr.rel (%p238) target = $region44
        $region43: #{tpu_custom_call.1} parent=39 // pred_region
          %241 = dma.done %s234, 384
        $region44: #{tpu_custom_call.1} parent=39 // pred_fallthru
          _
        // Predicated region
        $region45: #{tpu_custom_call.1} parent=39 // pred_check
          %p242 = pneg %p65
        $region46: #{tpu_custom_call.1} parent=39 // pred_check_branch
          %244 = sbr.rel (%p242) target = $region48
        $region47: #{tpu_custom_call.1} parent=39 // pred_region
          %245 = dma.done [#allocation6], 2048
        $region48: #{tpu_custom_call.1} parent=39 // pred_fallthru
          _
        // Predicated region
        $region49: #{tpu_custom_call.1} parent=39 // pred_check
          %p246 = pneg %p107
        $region50: #{tpu_custom_call.1} parent=39 // pred_check_branch
          %248 = sbr.rel (%p246) target = $region52
        $region51: #{tpu_custom_call.1} parent=39 // pred_region
          %249 = dma.done [#allocation6], 2048
        $region52: #{tpu_custom_call.1} parent=39 // pred_fallthru
          _
        %s250 = sand.u32 %s31, 1
        %s251 = scalar_lea.sflag [#allocation3], %s250
        %s252 = sand.u32 %s31, 1
        %s253 = smul.addr %s252, 24
        %s254 = scalar_lea.vmem [#allocation2], %s253
        %p255 = pneg %p44
        %p256 = pneg %p41
        %p257 = pneg %p65
        %p258 = pneg %p62
        %p259 = pneg %p86
        %p260 = pneg %p83
        %p261 = pneg %p107
        %p262 = pneg %p104
        %p263 = pneg %p128
        %p264 = pneg %p125
        %p265 = pneg %p154
        %p266 = pneg %p151
        %s267 = sand.u32 %s141, 1
        %s268 = scalar_lea.sflag [#allocation4], %s267
        %s269 = sand.u32 %s141, 1
        %s270 = smul.addr %s269, 24
        %s271 = scalar_lea.vmem [#allocation8], %s270
        %s272 = smul.u32 3, %s23
        %s273 = smul.u32 3, %s23
        %v275 = vld [vmem:[%s237] sm:$0xff]
        %v276 = vld [vmem:[%s237 + $0x8] sm:$0xff]
        %v277 = vld [vmem:[%s237 + $0x10] sm:$0xff]
        %v278 = vpack.c.bf16 %v276, %v275
        %v279 = vpack.c.bf16 %v277, %v277
        %v280 = vld [vmem:[#allocation5] sm:$0xff]
        %v281 = vld [vmem:[#allocation5 + $0x8] sm:$0xff]
        %v282 = vld [vmem:[#allocation5 + $0x10] sm:$0xff]
        %v283 = vld [vmem:[#allocation5 + $0x18] sm:$0xff]
        %v284 = vld [vmem:[#allocation5 + $0x20] sm:$0xff]
        %v285 = vld [vmem:[#allocation5 + $0x28] sm:$0xff]
        %v286 = vld [vmem:[#allocation5 + $0x30] sm:$0xff]
        %v287 = vld [vmem:[#allocation5 + $0x38] sm:$0xff]
        %v288 = vld [vmem:[#allocation5 + $0x40] sm:$0xff]
        %v289 = vld [vmem:[#allocation5 + $0x48] sm:$0xff]
        %v290 = vld [vmem:[#allocation5 + $0x50] sm:$0xff]
        %v291 = vld [vmem:[#allocation5 + $0x58] sm:$0xff]
        %v292 = vld [vmem:[#allocation5 + $0x60] sm:$0xff]
        %v293 = vld [vmem:[#allocation5 + $0x68] sm:$0xff]
        %v294 = vld [vmem:[#allocation5 + $0x70] sm:$0xff]
        %v295 = vld [vmem:[#allocation5 + $0x78] sm:$0xff]
        %v296 = vld [vmem:[%s2] sm:$0x3]
        %v298 = vlaneseq
        %v299 = vshrl.u32 %v298, 7
        %v300 = vsub.s32 0, %v299
        %v301 = vrot.slane %v296, %v300
        %v302 = vlaneseq
        %v303 = vshrl.u32 %v302, 7
        %v304 = vsub.s32 1, %v303
        %v305 = vrot.slane %v296, %v304
        %v324 = vunpack.c.l.b16 %v280
        %v325 = vunpack.c.h.b16 %v280
        %v326 = vunpack.c.l.b16 %v281
        %v327 = vunpack.c.h.b16 %v281
        %v328 = vunpack.c.l.b16 %v282
        %v329 = vunpack.c.h.b16 %v282
        %v330 = vunpack.c.l.b16 %v283
        %v331 = vunpack.c.h.b16 %v283
        %v332 = vunpack.c.l.b16 %v284
        %v333 = vunpack.c.h.b16 %v284
        %v334 = vunpack.c.l.b16 %v285
        %v335 = vunpack.c.h.b16 %v285
        %v336 = vunpack.c.l.b16 %v286
        %v337 = vunpack.c.h.b16 %v286
        %v338 = vunpack.c.l.b16 %v287
        %v339 = vunpack.c.h.b16 %v287
        %v340 = vunpack.c.l.b16 %v288
        %v341 = vunpack.c.h.b16 %v288
        %v342 = vunpack.c.l.b16 %v289
        %v343 = vunpack.c.h.b16 %v289
        %v344 = vunpack.c.l.b16 %v290
        %v345 = vunpack.c.h.b16 %v290
        %v346 = vunpack.c.l.b16 %v291
        %v347 = vunpack.c.h.b16 %v291
        %v348 = vunpack.c.l.b16 %v292
        %v349 = vunpack.c.h.b16 %v292
        %v350 = vunpack.c.l.b16 %v293
        %v351 = vunpack.c.h.b16 %v293
        %v352 = vunpack.c.l.b16 %v294
        %v353 = vunpack.c.h.b16 %v294
        %v354 = vunpack.c.l.b16 %v295
        %v355 = vunpack.c.h.b16 %v295
        %v356 = vpack.c.b16 %v326, %v324
        %v357 = vpack.c.b16 %v327, %v325
        %v358 = vpack.c.b16 %v330, %v328
        %v359 = vpack.c.b16 %v331, %v329
        %v360 = vpack.c.b16 %v334, %v332
        %v361 = vpack.c.b16 %v335, %v333
        %v362 = vpack.c.b16 %v338, %v336
        %v363 = vpack.c.b16 %v339, %v337
        %v364 = vpack.c.b16 %v342, %v340
        %v365 = vpack.c.b16 %v343, %v341
        %v366 = vpack.c.b16 %v346, %v344
        %v367 = vpack.c.b16 %v347, %v345
        %v368 = vpack.c.b16 %v350, %v348
        %v369 = vpack.c.b16 %v351, %v349
        %v370 = vpack.c.b16 %v354, %v352
        %v371 = vpack.c.b16 %v355, %v353
        %388 = vmatprep.subr.bf16.mxu0 %v371
        %389 = vmatpush1.bf16.msra.mxu0 %v370
        %390 = vmatprep.subr.bf16.mxu0 %v369
        %391 = vmatpush1.bf16.msra.mxu0 %v368
        %392 = vmatprep.subr.bf16.mxu0 %v367
        %393 = vmatpush1.bf16.msra.mxu0 %v366
        %394 = vmatprep.subr.bf16.mxu0 %v365
        %395 = vmatpush1.bf16.msra.mxu0 %v364
        %396 = vmatprep.subr.bf16.mxu0 %v363
        %397 = vmatpush1.bf16.msra.mxu0 %v362
        %398 = vmatprep.subr.bf16.mxu0 %v361
        %399 = vmatpush1.bf16.msra.mxu0 %v360
        %400 = vmatprep.subr.bf16.mxu0 %v359
        %401 = vmatpush1.bf16.msra.mxu0 %v358
        %402 = vmatprep.subr.bf16.mxu0 %v357
        %403 = vmatpush1.bf16.msra.mxu0 %v356
        %404 = vmatprep.subr.bf16.mxu0 0
        %405 = vmatpush2.bf16.msra.mxu0 0
        %406 = vmatprep.subr.bf16.mxu0 0
        %407 = vmatpush2.bf16.msra.mxu0 0
        %408 = vmatprep.subr.bf16.mxu0 0
        %409 = vmatpush2.bf16.msra.mxu0 0
        %410 = vmatprep.subr.bf16.mxu0 0
        %411 = vmatpush2.bf16.msra.mxu0 0
        %412 = vmatprep.subr.bf16.mxu0 0
        %413 = vmatpush2.bf16.msra.mxu0 0
        %414 = vmatprep.subr.bf16.mxu0 0
        %415 = vmatpush2.bf16.msra.mxu0 0
        %416 = vmatprep.subr.bf16.mxu0 0
        %417 = vmatpush2.bf16.msra.mxu0 0
        %418 = vmatprep.subr.bf16.mxu0 0
        %419 = vmatpush2.bf16.msra.mxu0 0
        %420 = vmatprep.mubr.bf16.mxu0 0
        %421 = vmatmul.mubr.bf16.gmra.mxu0 %v278
        %v422 = vpop.f32.mrf.mxu0
        %v423 = vadd.f32 %v301, %v422
        %v424 = vpop.f32.mrf.mxu0
        %v425 = vadd.f32 %v305, %v424
        %v426 = vpop.f32.mrf.mxu0
        %v427 = vadd.f32 %v301, %v426
        %v428 = vpop.f32.mrf.mxu0
        %v429 = vadd.f32 %v305, %v428
        %430 = vmatprep.mubr.bf16.mxu0 0
        %431 = vmatmul.mubr.bf16.gmra.mxu0 %v279
        %v432 = vpop.f32.mrf.mxu0
        %v433 = vadd.f32 %v301, %v432
        %v434 = vpop.f32.mrf.mxu0
        %v435 = vadd.f32 %v305, %v434
        %v436 = vpop.f32.mrf.mxu0
        %v437 = vpop.f32.mrf.mxu0
        %438 = vdwg.mxu0
        %v439 = vmax.f32 %v423, 0.0
        %v440 = vmax.f32 %v425, 0.0
        %v441 = vmax.f32 %v427, 0.0
        %v442 = vmax.f32 %v429, 0.0
        %v443 = vmax.f32 %v433, 0.0
        %v444 = vmax.f32 %v435, 0.0
        %v445 = vpack.c.bf16 %v441, %v439
        %v446 = vpack.c.bf16 %v442, %v440
        %v447 = vpack.c.bf16 %v443, %v443
        %v448 = vpack.c.bf16 %v444, %v444
        %v449 = vld [vmem:[#allocation7] sm:$0xf]
        %v450 = vld [vmem:[#allocation7 + $0x4] sm:$0xf]
        %v451 = vld [vmem:[#allocation7 + $0x8] sm:$0xf]
        %v452 = vld [vmem:[#allocation7 + $0xc] sm:$0xf]
        %v453 = vld [vmem:[#allocation7 + $0x10] sm:$0xf]
        %v454 = vld [vmem:[#allocation7 + $0x14] sm:$0xf]
        %v455 = vld [vmem:[#allocation7 + $0x18] sm:$0xf]
        %v456 = vld [vmem:[#allocation7 + $0x1c] sm:$0xf]
        %v457 = vld [vmem:[#allocation7 + $0x20] sm:$0xf]
        %v458 = vld [vmem:[#allocation7 + $0x24] sm:$0xf]
        %v459 = vld [vmem:[#allocation7 + $0x28] sm:$0xf]
        %v460 = vld [vmem:[#allocation7 + $0x2c] sm:$0xf]
        %v461 = vld [vmem:[#allocation7 + $0x30] sm:$0xf]
        %v462 = vld [vmem:[#allocation7 + $0x34] sm:$0xf]
        %v463 = vld [vmem:[#allocation7 + $0x38] sm:$0xf]
        %v464 = vld [vmem:[#allocation7 + $0x3c] sm:$0xf]
        %v465 = vld [vmem:[#allocation7 + $0x40] sm:$0xf]
        %v466 = vld [vmem:[#allocation7 + $0x44] sm:$0xf]
        %v467 = vld [vmem:[#allocation7 + $0x48] sm:$0xf]
        %v468 = vld [vmem:[#allocation7 + $0x4c] sm:$0xf]
        %v469 = vld [vmem:[#allocation7 + $0x50] sm:$0xf]
        %v470 = vld [vmem:[#allocation7 + $0x54] sm:$0xf]
        %v471 = vld [vmem:[#allocation7 + $0x58] sm:$0xf]
        %v472 = vld [vmem:[#allocation7 + $0x5c] sm:$0xf]
        %v473 = vld [vmem:[#allocation7 + $0x60] sm:$0xf]
        %v474 = vld [vmem:[#allocation7 + $0x64] sm:$0xf]
        %v475 = vld [vmem:[#allocation7 + $0x68] sm:$0xf]
        %v476 = vld [vmem:[#allocation7 + $0x6c] sm:$0xf]
        %v477 = vld [vmem:[#allocation7 + $0x70] sm:$0xf]
        %v478 = vld [vmem:[#allocation7 + $0x74] sm:$0xf]
        %v479 = vld [vmem:[#allocation7 + $0x78] sm:$0xf]
        %v480 = vld [vmem:[#allocation7 + $0x7c] sm:$0xf]
        %v481 = vld [vmem:[%s4] sm:$0x1]
        %v483 = vlaneseq
        %v484 = vshrl.u32 %v483, 7
        %v485 = vsub.s32 0, %v484
        %v486 = vrot.slane %v481, %v485
        %v520 = vunpack.c.l.b16 %v449
        %v521 = vunpack.c.l.b16 %v450
        %v522 = vunpack.c.l.b16 %v451
        %v523 = vunpack.c.l.b16 %v452
        %v524 = vunpack.c.l.b16 %v453
        %v525 = vunpack.c.l.b16 %v454
        %v526 = vunpack.c.l.b16 %v455
        %v527 = vunpack.c.l.b16 %v456
        %v528 = vunpack.c.l.b16 %v457
        %v529 = vunpack.c.l.b16 %v458
        %v530 = vunpack.c.l.b16 %v459
        %v531 = vunpack.c.l.b16 %v460
        %v532 = vunpack.c.l.b16 %v461
        %v533 = vunpack.c.l.b16 %v462
        %v534 = vunpack.c.l.b16 %v463
        %v535 = vunpack.c.l.b16 %v464
        %v536 = vunpack.c.l.b16 %v465
        %v537 = vunpack.c.l.b16 %v466
        %v538 = vunpack.c.l.b16 %v467
        %v539 = vunpack.c.l.b16 %v468
        %v540 = vunpack.c.l.b16 %v469
        %v541 = vunpack.c.l.b16 %v470
        %v542 = vunpack.c.l.b16 %v471
        %v543 = vunpack.c.l.b16 %v472
        %v544 = vunpack.c.l.b16 %v473
        %v545 = vunpack.c.l.b16 %v474
        %v546 = vunpack.c.l.b16 %v475
        %v547 = vunpack.c.l.b16 %v476
        %v548 = vunpack.c.l.b16 %v477
        %v549 = vunpack.c.l.b16 %v478
        %v550 = vunpack.c.l.b16 %v479
        %v551 = vunpack.c.l.b16 %v480
        %v552 = vpack.c.b16 %v521, %v520
        %v553 = vpack.c.b16 %v523, %v522
        %v554 = vpack.c.b16 %v525, %v524
        %v555 = vpack.c.b16 %v527, %v526
        %v556 = vpack.c.b16 %v529, %v528
        %v557 = vpack.c.b16 %v531, %v530
        %v558 = vpack.c.b16 %v533, %v532
        %v559 = vpack.c.b16 %v535, %v534
        %v560 = vpack.c.b16 %v537, %v536
        %v561 = vpack.c.b16 %v539, %v538
        %v562 = vpack.c.b16 %v541, %v540
        %v563 = vpack.c.b16 %v543, %v542
        %v564 = vpack.c.b16 %v545, %v544
        %v565 = vpack.c.b16 %v547, %v546
        %v566 = vpack.c.b16 %v549, %v548
        %v567 = vpack.c.b16 %v551, %v550
        %584 = vmatprep.subr.bf16.mxu0 0
        %585 = vmatpush1.bf16.msra.mxu0 %v559
        %586 = vmatprep.subr.bf16.mxu0 0
        %587 = vmatpush1.bf16.msra.mxu0 %v558
        %588 = vmatprep.subr.bf16.mxu0 0
        %589 = vmatpush1.bf16.msra.mxu0 %v557
        %590 = vmatprep.subr.bf16.mxu0 0
        %591 = vmatpush1.bf16.msra.mxu0 %v556
        %592 = vmatprep.subr.bf16.mxu0 0
        %593 = vmatpush1.bf16.msra.mxu0 %v555
        %594 = vmatprep.subr.bf16.mxu0 0
        %595 = vmatpush1.bf16.msra.mxu0 %v554
        %596 = vmatprep.subr.bf16.mxu0 0
        %597 = vmatpush1.bf16.msra.mxu0 %v553
        %598 = vmatprep.subr.bf16.mxu0 0
        %599 = vmatpush1.bf16.msra.mxu0 %v552
        %600 = vmatprep.subr.bf16.mxu0 0
        %601 = vmatpush2.bf16.msra.mxu0 %v567
        %602 = vmatprep.subr.bf16.mxu0 0
        %603 = vmatpush2.bf16.msra.mxu0 %v566
        %604 = vmatprep.subr.bf16.mxu0 0
        %605 = vmatpush2.bf16.msra.mxu0 %v565
        %606 = vmatprep.subr.bf16.mxu0 0
        %607 = vmatpush2.bf16.msra.mxu0 %v564
        %608 = vmatprep.subr.bf16.mxu0 0
        %609 = vmatpush2.bf16.msra.mxu0 %v563
        %610 = vmatprep.subr.bf16.mxu0 0
        %611 = vmatpush2.bf16.msra.mxu0 %v562
        %612 = vmatprep.subr.bf16.mxu0 0
        %613 = vmatpush2.bf16.msra.mxu0 %v561
        %614 = vmatprep.subr.bf16.mxu0 0
        %615 = vmatpush2.bf16.msra.mxu0 %v560
        %616 = vmatprep.mubr.bf16.mxu0 %v446
        %617 = vmatmul.mubr.bf16.gmra.mxu0 %v445
        %v618 = vpop.f32.mrf.mxu0
        %v619 = vadd.f32 %v486, %v618
        %v620 = vpop.f32.mrf.mxu0
        %v621 = vpop.f32.mrf.mxu0
        %v622 = vadd.f32 %v486, %v621
        %v623 = vpop.f32.mrf.mxu0
        %624 = vmatprep.mubr.bf16.mxu0 %v448
        %625 = vmatmul.mubr.bf16.gmra.mxu0 %v447
        %v626 = vpop.f32.mrf.mxu0
        %v627 = vadd.f32 %v486, %v626
        %v628 = vpop.f32.mrf.mxu0
        %v629 = vpop.f32.mrf.mxu0
        %v630 = vpop.f32.mrf.mxu0
        %631 = vdwg.mxu0
        %632 = vst [vmem:[%s271] sm:$0xff] %v619
        %633 = vst [vmem:[%s271 + $0x8] sm:$0xff] %v622
        %634 = vst [vmem:[%s271 + $0x10] sm:$0xff] %v627
        %s635 = sand.u32 %s141, 1
        %s636 = scalar_lea.sflag [#allocation4], %s635
        %s637 = sand.u32 %s141, 1
        %s638 = smul.addr %s637, 24
        %s639 = scalar_lea.vmem [#allocation8], %s638
        // Predicated region
        $region53: #{tpu_custom_call.1} parent=39 // pred_check
          %p640 = pneg %p151
        $region54: #{tpu_custom_call.1} parent=39 // pred_check_branch
          %642 = sbr.rel (%p640) target = $region56
        $region55: #{tpu_custom_call.1} parent=39 // pred_region
          %s643 = smul.u32 3, %s23
          %s645 = ssub.s32 384, 384
          %646 = vsyncadd %s636, %s645
          %s647 = smul.addr %s643, 128
          %s648 = scalar_lea.hbm %s5, %s647
          %s649 = sshll.u32 %s639, 4
          %s650 = int_to_ptr.vmem [resolvable:$true] %s649
          %655 = dma.vmem_to_hbm [thread:$0]  %s650, 384, %s648, %s636, 128, 128, 8
        $region56: #{tpu_custom_call.1} parent=39 // pred_fallthru
          _
      $region40: #{tpu_custom_call.1} parent=5 // pred_fallthru
        _
      %p656 = scmp.le.s32.totalorder 2, %s18
      // Predicated region
      $region57: #{tpu_custom_call.1} parent=5 // pred_check
        %p657 = pneg %p656
      $region58: #{tpu_custom_call.1} parent=5 // pred_check_branch
        %659 = sbr.rel (%p657) target = $region60
      $region59: #{tpu_custom_call.1} parent=5 // pred_region
        %s660 = ssub.s32 %s18, 2
        // Predicated region
        $region61: #{tpu_custom_call.1} parent=59 // pred_check
          %p661 = pneg %p157
        $region62: #{tpu_custom_call.1} parent=59 // pred_check_branch
          %663 = sbr.rel (%p661) target = $region64
        $region63: #{tpu_custom_call.1} parent=59 // pred_region
          %s664 = sand.u32 %s142, 1
          %s665 = scalar_lea.sflag [#allocation4], %s664
          %s666 = sand.u32 %s142, 1
          %s667 = smul.addr %s666, 24
          %s668 = scalar_lea.vmem [#allocation8], %s667
          %669 = dma.done %s665, 384
        $region64: #{tpu_custom_call.1} parent=59 // pred_fallthru
          _
      $region60: #{tpu_custom_call.1} parent=5 // pred_fallthru
        _
    $region6: #{tpu_custom_call.1} parent=1 // loop_footer
      %s22 = sadd.s32 1, %s18
    $region7: #{tpu_custom_call.1} parent=1 // loop_footer_branch
      %17 = sbr.rel target = $region3
    $region8: #{tpu_custom_call.1} parent=1 // loop_exit
      _
    %670 = vsyncpa [#allocation3], 1
    %s671 = scalar_lea.sflag [#allocation3], 1
    %672 = vsyncpa %s671, 1
    %673 = vsyncpa [#allocation6], 1
    %674 = vsyncpa [#allocation4], 1
    %s675 = scalar_lea.sflag [#allocation4], 1
    %676 = vsyncpa %s675, 1

</llo_original>
